<compile_context>
chip_gen: v5e
topology: v5e:2x2
jax: 0.10.0
libtpu: 0.0.40
codegen_flags: <defaults>
</compile_context>

<pallas_src>
import math
import numpy as np
import jax
import jax.numpy as jnp
from jax.experimental import pallas as pl
from jax.experimental.pallas import tpu as pltpu


def _dft_matrix(n):
    """Re/Im of the n-point DFT matrix F[j,k] = exp(-2*pi*i*j*k/n).

    j*k is reduced mod n in int64 before the float conversion so the angles
    stay small and exact even for large n (review correctness concern).
    """
    k = np.arange(n, dtype=np.int64)
    kk = (k[:, None] * k[None, :]) % n
    ang = -2.0 * np.pi * kk.astype(np.float64) / float(n)
    return (jnp.asarray(np.cos(ang), dtype=jnp.float32),
            jnp.asarray(np.sin(ang), dtype=jnp.float32))


def _build_mask(H, W, params):
    """(H, W) radial band-pass mask, already ifftshift-ed.

    fftshift/ifftshift of the spectrum are folded into the mask:
        ifftshift(fftshift(X) * m) == X * ifftshift(m).
    """
    aa, bb = jnp.meshgrid(jnp.arange(H, dtype=jnp.float32),
                          jnp.arange(W, dtype=jnp.float32), indexing="ij")
    dist = jnp.sqrt((aa - H / 2.0) ** 2 + (bb - W / 2.0) ** 2)
    diag = math.sqrt(H * H + W * W) / 2.0

    rs = [params[f"radius{i}"] for i in range(1, 9)]
    vs = [params[f"radius{i}_val"] for i in range(1, 9)]
    sigs = [jax.nn.sigmoid(diag * r - dist) for r in rs]

    mask = sigs[0] * vs[0]
    for i in range(1, 8):
        mask = mask + (sigs[i] - sigs[i - 1]) * vs[i]

    return jnp.fft.ifftshift(mask).astype(jnp.float32)


def _make_kernel(TB, H, W):
    def kernel(x_ref, fw_ref, gf_ref, gi_ref, mm_ref, o_ref):
        # x block: (TB, H, W) real images.
        x2 = x_ref[...].reshape(TB * H, W)

        # ---- forward DFT along W: one big matmul, M = TB*H ----
        # fw = [Re(F_W) | Im(F_W)] : (W, 2W)  ->  c = [Cr | Ci] : (TB*H, 2W)
        c = jnp.dot(x2, fw_ref[...], preferred_element_type=jnp.float32)
        cr = c[:, :W].reshape(TB, H, W)
        ci = c[:, W:].reshape(TB, H, W)
        cc = jnp.concatenate([cr, ci], axis=1)              # (TB, 2H, W) = [Cr; Ci]

        # ---- forward DFT along H: one batched einsum (fused real/imag) ----
        # gf = [[Fhr, -Fhi], [Fhi, Fhr]] : (2H, 2H)  ->  y = [Yr; Yi]
        gf = jnp.broadcast_to(gf_ref[...], (TB, 2 * H, 2 * H))
        y = jnp.einsum("bpq,bqw->bpw", gf, cc,
                       preferred_element_type=jnp.float32)  # (TB, 2H, W)

        # ---- band-pass mask (ifftshifted, 1/(H*W) folded in) ----
        z = y * mm_ref[...][None, :, :]                     # (2H, W) bcast over TB

        # ---- inverse DFT along H: one batched einsum ----
        # gi = [[Fhr, Fhi], [-Fhi, Fhr]] : (2H, 2H)  ->  [Br; Bi]
        gi = jnp.broadcast_to(gi_ref[...], (TB, 2 * H, 2 * H))
        br_bi = jnp.einsum("bpq,bqw->bpw", gi, z,
                           preferred_element_type=jnp.float32)  # (TB, 2H, W)

        # ---- inverse DFT along W, real part only: one big matmul, M = 2*TB*H ----
        # [Br; Bi] @ [Fwr | Fwi]  ->  out = Br@Fwr + Bi@Fwi
        t = jnp.dot(br_bi.reshape(TB * 2 * H, W), fw_ref[...],
                    preferred_element_type=jnp.float32)      # (TB*2H, 2W)
        t = t.reshape(TB, 2 * H, 2 * W)
        out = t[:, :H, :W] + t[:, H:, W:]

        o_ref[...] = out.astype(o_ref.dtype)

    return kernel


def pass_filter(x, params, *, tb=None):
    """PassFilter forward: radial band-pass in the 2D Fourier domain.

    x: (B, C, H, W) float32 -> filtered real image of the same shape.
    """
    B, C, H, W = x.shape
    BC = B * C
    xr = x.reshape(BC, H, W).astype(jnp.float32)

    # Images per grid step: aim for >= 256 matmul rows, cap by VMEM footprint.
    if tb is None:
        tb_cap = max(1, (8 * 1024 * 1024) // (16 * H * W * 4))
        tb = min(BC, max(1, 256 // max(H, 1)), tb_cap)
        tb = max(tb, 1)
        if H % 8 != 0:
            tb = 1  # keep the in-kernel reshapes trivial for unaligned H
    bc_pad = ((BC + tb - 1) // tb) * tb
    if bc_pad != BC:
        xr = jnp.pad(xr, ((0, bc_pad - BC), (0, 0), (0, 0)))

    # Host-side constants (tiny).
    fhr, fhi = _dft_matrix(H)
    fwr, fwi = _dft_matrix(W)
    fw = jnp.concatenate([fwr, fwi], axis=1)                  # (W, 2W)  [Fwr|Fwi]
    gf = jnp.block([[fhr, -fhi], [fhi, fhr]])                 # (2H, 2H) fwd H-DFT
    gi = jnp.block([[fhr, fhi], [-fhi, fhr]])                 # (2H, 2H) inv H-DFT
    m = _build_mask(H, W, params) * (1.0 / float(H * W))      # fold iFFT norm
    mm = jnp.concatenate([m, m], axis=0)                      # (2H, W) for [Yr;Yi]

    kernel = _make_kernel(tb, H, W)
    grid = bc_pad // tb

    out = pl.pallas_call(
        kernel,
        out_shape=jax.ShapeDtypeStruct((bc_pad, H, W), jnp.float32),
        grid_spec=pltpu.PrefetchScalarGridSpec(
            num_scalar_prefetch=0,
            grid=(grid,),
            in_specs=[
                pl.BlockSpec((tb, H, W), lambda i: (i, 0, 0)),      # image batch
                pl.BlockSpec((W, 2 * W), lambda i: (0, 0)),         # [Fwr | Fwi]
                pl.BlockSpec((2 * H, 2 * H), lambda i: (0, 0)),     # fwd H-DFT
                pl.BlockSpec((2 * H, 2 * H), lambda i: (0, 0)),     # inv H-DFT
                pl.BlockSpec((2 * H, W), lambda i: (0, 0)),         # stacked mask
            ],
            out_specs=pl.BlockSpec((tb, H, W), lambda i: (i, 0, 0)),
        ),
        compiler_params=pltpu.CompilerParams(
            dimension_semantics=("parallel",),
            vmem_limit_bytes=32 * 1024 * 1024,
        ),
    )(xr, fw, gf, gi, mm)

    return out[:BC].reshape(B, C, H, W)


def pass_filter_reference(x, params):
    """Pure-JAX reference mirroring the PyTorch forward (for verification)."""
    B, C, H, W = x.shape
    mask = _build_mask(H, W, params)  # already ifftshift-ed
    xf = jnp.fft.fftn(x, axes=(-1, -2))
    low = xf * mask[None, None]
    low = jnp.fft.ifftn(low, axes=(-1, -2))
    return low.real.astype(jnp.float32)


if __name__ == "__main__":
    # Deterministic parameters exactly as in PassFilter.__init__
    params = {
        "radius1": 0.1, "radius1_val": 0.0,
        "radius2": 0.17, "radius2_val": 2.0,
        "radius3": 0.25, "radius3_val": 2.0,
        "radius4": 0.5, "radius4_val": 2.0,
        "radius5": 0.6, "radius5_val": 2.0,
        "radius6": 0.7, "radius6_val": 2.0,
        "radius7": 0.9, "radius7_val": 2.0,
        "radius8": 1.0, "radius8_val": 2.0,
    }

    key = jax.random.PRNGKey(0)
    x = jax.random.normal(key, (2, 4, 16, 16), dtype=jnp.float32)

    out = jax.block_until_ready(pass_filter(x, params))

    ref = pass_filter_reference(x, params)
    assert out.shape == (2, 4, 16, 16)
    assert jnp.allclose(out, ref, rtol=1e-3, atol=1e-3), (
        float(jnp.max(jnp.abs(out - ref))))

    print("KERNEL_OK")
</pallas_src>

<mosaic_0001>
module attributes {stable_mosaic.version = 11 : i64} {
  func.func @kernel(%arg0: i32, %arg1: memref<8x16x16xf32, #tpu.memory_space<vmem>>, %arg2: memref<16x32xf32, #tpu.memory_space<vmem>>, %arg3: memref<32x32xf32, #tpu.memory_space<vmem>>, %arg4: memref<32x32xf32, #tpu.memory_space<vmem>>, %arg5: memref<32x16xf32, #tpu.memory_space<vmem>>, %arg6: memref<8x16x16xf32, #tpu.memory_space<vmem>>) attributes {dimension_semantics = [#tpu.dimension_semantics<parallel>], iteration_bounds = array<i64: 1>, scalar_prefetch = 0 : i64, scratch_operands = 0 : i64, tpu.core_type = #tpu.core_type<tc>, window_params = [{transform_indices = @transform_0, window_bounds = array<i64: 8, 16, 16>}, {pipeline_mode = #tpu.pipeline_mode<synchronous>, transform_indices = @transform_1, window_bounds = array<i64: 16, 32>}, {pipeline_mode = #tpu.pipeline_mode<synchronous>, transform_indices = @transform_2, window_bounds = array<i64: 32, 32>}, {pipeline_mode = #tpu.pipeline_mode<synchronous>, transform_indices = @transform_3, window_bounds = array<i64: 32, 32>}, {pipeline_mode = #tpu.pipeline_mode<synchronous>, transform_indices = @transform_4, window_bounds = array<i64: 32, 16>}, {transform_indices = @transform_5, window_bounds = array<i64: 8, 16, 16>}]} {
    %c0 = arith.constant 0 : index
    %c0_0 = arith.constant 0 : index
    %c0_1 = arith.constant 0 : index
    %0 = vector.load %arg1[%c0, %c0_0, %c0_1] : memref<8x16x16xf32, #tpu.memory_space<vmem>>, vector<8x16x16xf32>
    %1 = vector.shape_cast %0 : vector<8x16x16xf32> to vector<128x16xf32>
    %c0_2 = arith.constant 0 : index
    %c0_3 = arith.constant 0 : index
    %2 = vector.load %arg2[%c0_2, %c0_3] : memref<16x32xf32, #tpu.memory_space<vmem>>, vector<16x32xf32>
    %cst = arith.constant dense<0.000000e+00> : vector<128x32xf32>
    %3 = tpu.matmul %1, %2, %cst {dimension_numbers = #tpu.dot_dimension_numbers<[1], [0], [0], [1], [0, 0, 1, 1], [], []>} : vector<128x16xf32>, vector<16x32xf32>, vector<128x32xf32> -> vector<128x32xf32>
    %4 = vector.extract_strided_slice %3 {offsets = [0, 0], sizes = [128, 16], strides = [1, 1]} : vector<128x32xf32> to vector<128x16xf32>
    %5 = vector.shape_cast %4 : vector<128x16xf32> to vector<8x16x16xf32>
    %6 = vector.extract_strided_slice %3 {offsets = [0, 16], sizes = [128, 16], strides = [1, 1]} : vector<128x32xf32> to vector<128x16xf32>
    %7 = vector.shape_cast %6 : vector<128x16xf32> to vector<8x16x16xf32>
    %8 = tpu.concatenate %5, %7 in 1 : vector<8x16x16xf32>, vector<8x16x16xf32> -> vector<8x32x16xf32>
    %c0_4 = arith.constant 0 : index
    %c0_5 = arith.constant 0 : index
    %9 = vector.load %arg3[%c0_4, %c0_5] : memref<32x32xf32, #tpu.memory_space<vmem>>, vector<32x32xf32>
    %10 = vector.shape_cast %9 : vector<32x32xf32> to vector<1x32x32xf32>
    %11 = vector.broadcast %10 : vector<1x32x32xf32> to vector<8x32x32xf32>
    "tpu.trace_start"() <{level = 10 : i32, message = "bpq,bqw->bpw"}> : () -> ()
    %cst_6 = arith.constant dense<0.000000e+00> : vector<8x32x16xf32>
    %12 = tpu.matmul %11, %8, %cst_6 {dimension_numbers = #tpu.dot_dimension_numbers<[2], [1], [1], [2], [0, 0, 0, 1, 1, 2], [0], [0]>} : vector<8x32x32xf32>, vector<8x32x16xf32>, vector<8x32x16xf32> -> vector<8x32x16xf32>
    "tpu.trace_stop"() : () -> ()
    %c0_7 = arith.constant 0 : index
    %c0_8 = arith.constant 0 : index
    %13 = vector.load %arg5[%c0_7, %c0_8] : memref<32x16xf32, #tpu.memory_space<vmem>>, vector<32x16xf32>
    %14 = vector.shape_cast %13 : vector<32x16xf32> to vector<1x32x16xf32>
    %15 = vector.broadcast %14 : vector<1x32x16xf32> to vector<8x32x16xf32>
    %16 = arith.mulf %12, %15 : vector<8x32x16xf32>
    %c0_9 = arith.constant 0 : index
    %c0_10 = arith.constant 0 : index
    %17 = vector.load %arg4[%c0_9, %c0_10] : memref<32x32xf32, #tpu.memory_space<vmem>>, vector<32x32xf32>
    %18 = vector.shape_cast %17 : vector<32x32xf32> to vector<1x32x32xf32>
    %19 = vector.broadcast %18 : vector<1x32x32xf32> to vector<8x32x32xf32>
    "tpu.trace_start"() <{level = 10 : i32, message = "bpq,bqw->bpw"}> : () -> ()
    %cst_11 = arith.constant dense<0.000000e+00> : vector<8x32x16xf32>
    %20 = tpu.matmul %19, %16, %cst_11 {dimension_numbers = #tpu.dot_dimension_numbers<[2], [1], [1], [2], [0, 0, 0, 1, 1, 2], [0], [0]>} : vector<8x32x32xf32>, vector<8x32x16xf32>, vector<8x32x16xf32> -> vector<8x32x16xf32>
    "tpu.trace_stop"() : () -> ()
    %21 = vector.shape_cast %20 : vector<8x32x16xf32> to vector<256x16xf32>
    %c0_12 = arith.constant 0 : index
    %c0_13 = arith.constant 0 : index
    %22 = vector.load %arg2[%c0_12, %c0_13] : memref<16x32xf32, #tpu.memory_space<vmem>>, vector<16x32xf32>
    %cst_14 = arith.constant dense<0.000000e+00> : vector<256x32xf32>
    %23 = tpu.matmul %21, %22, %cst_14 {dimension_numbers = #tpu.dot_dimension_numbers<[1], [0], [0], [1], [0, 0, 1, 1], [], []>} : vector<256x16xf32>, vector<16x32xf32>, vector<256x32xf32> -> vector<256x32xf32>
    %24 = vector.shape_cast %23 : vector<256x32xf32> to vector<8x32x32xf32>
    %25 = vector.extract_strided_slice %24 {offsets = [0, 0, 0], sizes = [8, 16, 16], strides = [1, 1, 1]} : vector<8x32x32xf32> to vector<8x16x16xf32>
    %26 = vector.extract_strided_slice %24 {offsets = [0, 16, 16], sizes = [8, 16, 16], strides = [1, 1, 1]} : vector<8x32x32xf32> to vector<8x16x16xf32>
    %27 = arith.addf %25, %26 : vector<8x16x16xf32>
    %c0_15 = arith.constant 0 : index
    %c0_16 = arith.constant 0 : index
    %c0_17 = arith.constant 0 : index
    %28 = vector.load %arg6[%c0_15, %c0_16, %c0_17] : memref<8x16x16xf32, #tpu.memory_space<vmem>>, vector<8x16x16xf32>
    tpu.vector_store %arg6[%c0_15, %c0_16, %c0_17], %27 {strides = array<i32>} : memref<8x16x16xf32, #tpu.memory_space<vmem>>, vector<8x16x16xf32>,
    return
  }
  func.func @transform_0(%arg0: i32) -> (i32, i32, i32) {
    %c0_i32 = arith.constant 0 : i32
    %c0_i32_0 = arith.constant 0 : i32
    %c0_i32_1 = arith.constant 0 : i32
    return %arg0, %c0_i32, %c0_i32_0 : i32, i32, i32
  }
  func.func @transform_1(%arg0: i32) -> (i32, i32) {
    %c0_i32 = arith.constant 0 : i32
    %c0_i32_0 = arith.constant 0 : i32
    %c0_i32_1 = arith.constant 0 : i32
    return %c0_i32, %c0_i32_0 : i32, i32
  }
  func.func @transform_2(%arg0: i32) -> (i32, i32) {
    %c0_i32 = arith.constant 0 : i32
    %c0_i32_0 = arith.constant 0 : i32
    %c0_i32_1 = arith.constant 0 : i32
    return %c0_i32, %c0_i32_0 : i32, i32
  }
  func.func @transform_3(%arg0: i32) -> (i32, i32) {
    %c0_i32 = arith.constant 0 : i32
    %c0_i32_0 = arith.constant 0 : i32
    %c0_i32_1 = arith.constant 0 : i32
    return %c0_i32, %c0_i32_0 : i32, i32
  }
  func.func @transform_4(%arg0: i32) -> (i32, i32) {
    %c0_i32 = arith.constant 0 : i32
    %c0_i32_0 = arith.constant 0 : i32
    %c0_i32_1 = arith.constant 0 : i32
    return %c0_i32, %c0_i32_0 : i32, i32
  }
  func.func @transform_5(%arg0: i32) -> (i32, i32, i32) {
    %c0_i32 = arith.constant 0 : i32
    %c0_i32_0 = arith.constant 0 : i32
    %c0_i32_1 = arith.constant 0 : i32
    return %arg0, %c0_i32, %c0_i32_0 : i32, i32, i32
  }
}

</mosaic_0001>

<llo_original>
// kernel: tpu_custom_call.1
$region0: #{tpu_custom_call.1}
  #allocation0 [shape = 'u32[]', space=smem, size = 0x4, offset = 0x4, fixed_abs, tag = 'smem constant byte address 0x4 - core index']
  #allocation1 [shape = 'u32[72,128]{1,0:T(1,128)}', space=vmem, size = 0x9000, scoped, tag = 'internal scratch']
  %s0 = inlined_call_operand.hbm [shape: f32[8,16,16], index: 0, kind: input, shape index: {}]
  %s1 = inlined_call_operand.vmem [shape: f32[16,32], index: 1, kind: input, shape index: {}]
  %s2 = inlined_call_operand.vmem [shape: f32[32,32], index: 2, kind: input, shape index: {}]
  %s3 = inlined_call_operand.hbm [shape: f32[32,32], index: 3, kind: input, shape index: {}]
  %s4 = inlined_call_operand.vmem [shape: f32[32,16], index: 4, kind: input, shape index: {}]
  %s5 = inlined_call_operand.hbm [shape: f32[8,16,16], index: 5, kind: output, shape index: {}]
  %s6 = sld [smem:[#allocation0]]
  $region38: #{tpu_custom_call.1} parent=0
    _
  %s8 = ssub.s32 1, %s6
  %s9 = scalar_select 0, %s8, %s6
  $region1: #{tpu_custom_call.1} parent=0
    #allocation2 [shape = 'u8[65536]{0}', space=vmem, size = 0x10000, scoped, tag = 'input window, operand 0, single buffered']
    #allocation3 [shape = 's32[1]{0}', space=sflag, size = 0x4, scoped, tag = 'scoped memory for tpu_custom_call.1']
    #allocation4 [shape = 's32[1]{0}', space=sflag, size = 0x4, scoped, tag = 'scoped memory for tpu_custom_call.1']
    #allocation5 [shape = 'u8[16384]{0}', space=vmem, size = 0x4000, scoped, tag = 'input window, operand 3, single buffered']
    #allocation6 [shape = 's32[1]{0}', space=sflag, size = 0x4, scoped, tag = 'scoped memory for tpu_custom_call.1']
    #allocation7 [shape = 'u8[65536]{0}', space=vmem, size = 0x10000, scoped, tag = 'output window, operand 0, single buffered']
    %10 = vsyncpa [#allocation3], 0
    %11 = vsyncpa [#allocation6], 0
    %12 = vsyncpa [#allocation4], 0
    // Predicated region
    $region2: #{tpu_custom_call.1} parent=1 // pred_check
      _
    $region3: #{tpu_custom_call.1} parent=1 // pred_check_branch
      %14 = sbr.rel (0) target = $region5
    $region4: #{tpu_custom_call.1} parent=1 // pred_region
      %16 = vsyncadd [#allocation3], 0
      %s17 = sshll.u32 %s0, 4
      %s18 = int_to_ptr.hbm [resolvable:$true] %s17
      %s19 = sshll.u32 [#allocation2], 4
      %s20 = int_to_ptr.vmem [resolvable:$true] %s19
      %25 = dma.hbm_to_vmem [thread:$0]  %s18, 2048, %s20, [#allocation3], 128, 128, 8
    $region5: #{tpu_custom_call.1} parent=1 // pred_fallthru
      _
    // Predicated region
    $region6: #{tpu_custom_call.1} parent=1 // pred_check
      _
    $region7: #{tpu_custom_call.1} parent=1 // pred_check_branch
      %27 = sbr.rel (0) target = $region9
    $region8: #{tpu_custom_call.1} parent=1 // pred_region
      _
    $region9: #{tpu_custom_call.1} parent=1 // pred_fallthru
      _
    // Predicated region
    $region10: #{tpu_custom_call.1} parent=1 // pred_check
      _
    $region11: #{tpu_custom_call.1} parent=1 // pred_check_branch
      %29 = sbr.rel (0) target = $region13
    $region12: #{tpu_custom_call.1} parent=1 // pred_region
      _
    $region13: #{tpu_custom_call.1} parent=1 // pred_fallthru
      _
    // Predicated region
    $region14: #{tpu_custom_call.1} parent=1 // pred_check
      _
    $region15: #{tpu_custom_call.1} parent=1 // pred_check_branch
      %31 = sbr.rel (0) target = $region17
    $region16: #{tpu_custom_call.1} parent=1 // pred_region
      %33 = vsyncadd [#allocation6], 0
      %s34 = sshll.u32 %s3, 4
      %s35 = int_to_ptr.hbm [resolvable:$true] %s34
      %s36 = sshll.u32 [#allocation5], 4
      %s37 = int_to_ptr.vmem [resolvable:$true] %s36
      %42 = dma.hbm_to_vmem [thread:$0]  %s35, 512, %s37, [#allocation6], 128, 128, 8
    $region17: #{tpu_custom_call.1} parent=1 // pred_fallthru
      _
    // Predicated region
    $region18: #{tpu_custom_call.1} parent=1 // pred_check
      _
    $region19: #{tpu_custom_call.1} parent=1 // pred_check_branch
      %44 = sbr.rel (0) target = $region21
    $region20: #{tpu_custom_call.1} parent=1 // pred_region
      _
    $region21: #{tpu_custom_call.1} parent=1 // pred_fallthru
      _
    // Predicated region
    $region22: #{tpu_custom_call.1} parent=1 // pred_check
      _
    $region23: #{tpu_custom_call.1} parent=1 // pred_check_branch
      %46 = sbr.rel (0) target = $region25
    $region24: #{tpu_custom_call.1} parent=1 // pred_region
      %48 = dma.done [#allocation3], 2048
    $region25: #{tpu_custom_call.1} parent=1 // pred_fallthru
      _
    // Predicated region
    $region26: #{tpu_custom_call.1} parent=1 // pred_check
      _
    $region27: #{tpu_custom_call.1} parent=1 // pred_check_branch
      %50 = sbr.rel (0) target = $region29
    $region28: #{tpu_custom_call.1} parent=1 // pred_region
      %52 = dma.done [#allocation6], 512
    $region29: #{tpu_custom_call.1} parent=1 // pred_fallthru
      _
    %v53 = vld [vmem:[#allocation2] sm:$0xff]
    %v54 = vld [vmem:[#allocation2 + $0x8] sm:$0xff]
    %v55 = vld [vmem:[#allocation2 + $0x10] sm:$0xff]
    %v56 = vld [vmem:[#allocation2 + $0x18] sm:$0xff]
    %v57 = vld [vmem:[#allocation2 + $0x20] sm:$0xff]
    %v58 = vld [vmem:[#allocation2 + $0x28] sm:$0xff]
    %v59 = vld [vmem:[#allocation2 + $0x30] sm:$0xff]
    %v60 = vld [vmem:[#allocation2 + $0x38] sm:$0xff]
    %v61 = vld [vmem:[#allocation2 + $0x40] sm:$0xff]
    %v62 = vld [vmem:[#allocation2 + $0x48] sm:$0xff]
    %v63 = vld [vmem:[#allocation2 + $0x50] sm:$0xff]
    %v64 = vld [vmem:[#allocation2 + $0x58] sm:$0xff]
    %v65 = vld [vmem:[#allocation2 + $0x60] sm:$0xff]
    %v66 = vld [vmem:[#allocation2 + $0x68] sm:$0xff]
    %v67 = vld [vmem:[#allocation2 + $0x70] sm:$0xff]
    %v68 = vld [vmem:[#allocation2 + $0x78] sm:$0xff]
    %v69 = vld [vmem:[%s1] sm:$0xff]
    %v70 = vld [vmem:[%s1 + $0x8] sm:$0xff]
    %vm71 = vcmask 130048
    %v73 = vsel %vm71, %v53, 0
    %v76 = vsel %vm71, %v54, 0
    %v79 = vsel %vm71, %v55, 0
    %v82 = vsel %vm71, %v56, 0
    %v85 = vsel %vm71, %v57, 0
    %v88 = vsel %vm71, %v58, 0
    %v91 = vsel %vm71, %v59, 0
    %v94 = vsel %vm71, %v60, 0
    %v97 = vsel %vm71, %v61, 0
    %v100 = vsel %vm71, %v62, 0
    %v103 = vsel %vm71, %v63, 0
    %v106 = vsel %vm71, %v64, 0
    %v109 = vsel %vm71, %v65, 0
    %v112 = vsel %vm71, %v66, 0
    %v115 = vsel %vm71, %v67, 0
    %v118 = vsel %vm71, %v68, 0
    %120 = vmatpush.msra.mxu0 0.0
    %121 = vmatpush.msra.mxu0 0.0
    %122 = vmatpush.msra.mxu0 0.0
    %123 = vmatpush.msra.mxu0 0.0
    %124 = vmatpush.msra.mxu0 0.0
    %125 = vmatpush.msra.mxu0 0.0
    %126 = vmatpush.msra.mxu0 0.0
    %127 = vmatpush.msra.mxu0 0.0
    %128 = vmatpush.msra.mxu0 0.0
    %129 = vmatpush.msra.mxu0 0.0
    %130 = vmatpush.msra.mxu0 0.0
    %131 = vmatpush.msra.mxu0 0.0
    %132 = vmatpush.msra.mxu0 0.0
    %133 = vmatpush.msra.mxu0 0.0
    %134 = vmatpush.msra.mxu0 %v70
    %135 = vmatpush.msra.mxu0 %v69
    %136 = vmatmul.f32.gmra.mxu0 %v73
    %v137 = vpop.f32.mrf.mxu0
    %v138 = vadd.f32 0.0, %v137
    %139 = vmatmul.f32.gmra.mxu0 %v76
    %v140 = vpop.f32.mrf.mxu0
    %v141 = vadd.f32 0.0, %v140
    %142 = vmatmul.f32.gmra.mxu0 %v79
    %v143 = vpop.f32.mrf.mxu0
    %v144 = vadd.f32 0.0, %v143
    %145 = vmatmul.f32.gmra.mxu0 %v82
    %v146 = vpop.f32.mrf.mxu0
    %v147 = vadd.f32 0.0, %v146
    %148 = vmatmul.f32.gmra.mxu0 %v85
    %v149 = vpop.f32.mrf.mxu0
    %v150 = vadd.f32 0.0, %v149
    %151 = vmatmul.f32.gmra.mxu0 %v88
    %v152 = vpop.f32.mrf.mxu0
    %v153 = vadd.f32 0.0, %v152
    %154 = vmatmul.f32.gmra.mxu0 %v91
    %v155 = vpop.f32.mrf.mxu0
    %v156 = vadd.f32 0.0, %v155
    %157 = vmatmul.f32.gmra.mxu0 %v94
    %v158 = vpop.f32.mrf.mxu0
    %v159 = vadd.f32 0.0, %v158
    %160 = vmatmul.f32.gmra.mxu0 %v97
    %v161 = vpop.f32.mrf.mxu0
    %v162 = vadd.f32 0.0, %v161
    %163 = vmatmul.f32.gmra.mxu0 %v100
    %v164 = vpop.f32.mrf.mxu0
    %v165 = vadd.f32 0.0, %v164
    %166 = vmatmul.f32.gmra.mxu0 %v103
    %v167 = vpop.f32.mrf.mxu0
    %v168 = vadd.f32 0.0, %v167
    %169 = vmatmul.f32.gmra.mxu0 %v106
    %v170 = vpop.f32.mrf.mxu0
    %v171 = vadd.f32 0.0, %v170
    %172 = vmatmul.f32.gmra.mxu0 %v109
    %v173 = vpop.f32.mrf.mxu0
    %v174 = vadd.f32 0.0, %v173
    %175 = vmatmul.f32.gmra.mxu0 %v112
    %v176 = vpop.f32.mrf.mxu0
    %v177 = vadd.f32 0.0, %v176
    %178 = vmatmul.f32.gmra.mxu0 %v115
    %v179 = vpop.f32.mrf.mxu0
    %v180 = vadd.f32 0.0, %v179
    %181 = vmatmul.f32.gmra.mxu0 %v118
    %v182 = vpop.f32.mrf.mxu0
    %v183 = vadd.f32 0.0, %v182
    %184 = vdwg.mxu0
    %201 = vrot.lane.b32.xlu0 %v138, 112
    %v202 = vpop.permute.xlu0 %201
    %203 = vrot.lane.b32.xlu0 %v141, 112
    %v204 = vpop.permute.xlu0 %203
    %205 = vrot.lane.b32.xlu0 %v144, 112
    %v206 = vpop.permute.xlu0 %205
    %207 = vrot.lane.b32.xlu0 %v147, 112
    %v208 = vpop.permute.xlu0 %207
    %209 = vrot.lane.b32.xlu0 %v150, 112
    %v210 = vpop.permute.xlu0 %209
    %211 = vrot.lane.b32.xlu0 %v153, 112
    %v212 = vpop.permute.xlu0 %211
    %213 = vrot.lane.b32.xlu0 %v156, 112
    %v214 = vpop.permute.xlu0 %213
    %215 = vrot.lane.b32.xlu0 %v159, 112
    %v216 = vpop.permute.xlu0 %215
    %217 = vrot.lane.b32.xlu0 %v162, 112
    %v218 = vpop.permute.xlu0 %217
    %219 = vrot.lane.b32.xlu0 %v165, 112
    %v220 = vpop.permute.xlu0 %219
    %221 = vrot.lane.b32.xlu0 %v168, 112
    %v222 = vpop.permute.xlu0 %221
    %223 = vrot.lane.b32.xlu0 %v171, 112
    %v224 = vpop.permute.xlu0 %223
    %225 = vrot.lane.b32.xlu0 %v174, 112
    %v226 = vpop.permute.xlu0 %225
    %227 = vrot.lane.b32.xlu0 %v177, 112
    %v228 = vpop.permute.xlu0 %227
    %229 = vrot.lane.b32.xlu0 %v180, 112
    %v230 = vpop.permute.xlu0 %229
    %231 = vrot.lane.b32.xlu0 %v183, 112
    %v232 = vpop.permute.xlu0 %231
    %v249 = vld [vmem:[%s2] sm:$0xff]
    %v250 = vld [vmem:[%s2 + $0x8] sm:$0xff]
    %v251 = vld [vmem:[%s2 + $0x10] sm:$0xff]
    %v252 = vld [vmem:[%s2 + $0x18] sm:$0xff]
    %vm253 = vcmask 261120
    %v255 = vsel %vm253, %v249, 0
    %v258 = vsel %vm253, %v250, 0
    %v261 = vsel %vm253, %v251, 0
    %v264 = vsel %vm253, %v252, 0
    %266 = vmatpush.msra.mxu0 0.0
    %267 = vmatpush.msra.mxu0 0.0
    %268 = vmatpush.msra.mxu0 0.0
    %269 = vmatpush.msra.mxu0 0.0
    %270 = vmatpush.msra.mxu0 0.0
    %271 = vmatpush.msra.mxu0 0.0
    %272 = vmatpush.msra.mxu0 0.0
    %273 = vmatpush.msra.mxu0 0.0
    %274 = vmatpush.msra.mxu0 0.0
    %275 = vmatpush.msra.mxu0 0.0
    %276 = vmatpush.msra.mxu0 0.0
    %277 = vmatpush.msra.mxu0 0.0
    %278 = vmatpush.msra.mxu0 %v204
    %279 = vmatpush.msra.mxu0 %v202
    %280 = vmatpush.msra.mxu0 %v141
    %281 = vmatpush.msra.mxu0 %v138
    %282 = vmatmul.f32.gmra.mxu0 %v255
    %v283 = vpop.f32.mrf.mxu0
    %v284 = vadd.f32 0.0, %v283
    %285 = vmatmul.f32.gmra.mxu0 %v258
    %v286 = vpop.f32.mrf.mxu0
    %v287 = vadd.f32 0.0, %v286
    %288 = vmatmul.f32.gmra.mxu0 %v261
    %v289 = vpop.f32.mrf.mxu0
    %v290 = vadd.f32 0.0, %v289
    %291 = vmatmul.f32.gmra.mxu0 %v264
    %v292 = vpop.f32.mrf.mxu0
    %v293 = vadd.f32 0.0, %v292
    %294 = vdwg.mxu0
    %295 = vmatpush.msra.mxu0 0.0
    %296 = vmatpush.msra.mxu0 0.0
    %297 = vmatpush.msra.mxu0 0.0
    %298 = vmatpush.msra.mxu0 0.0
    %299 = vmatpush.msra.mxu0 0.0
    %300 = vmatpush.msra.mxu0 0.0
    %301 = vmatpush.msra.mxu0 0.0
    %302 = vmatpush.msra.mxu0 0.0
    %303 = vmatpush.msra.mxu0 0.0
    %304 = vmatpush.msra.mxu0 0.0
    %305 = vmatpush.msra.mxu0 0.0
    %306 = vmatpush.msra.mxu0 0.0
    %307 = vmatpush.msra.mxu0 %v208
    %308 = vmatpush.msra.mxu0 %v206
    %309 = vmatpush.msra.mxu0 %v147
    %310 = vmatpush.msra.mxu0 %v144
    %311 = vmatmul.f32.gmra.mxu0 %v255
    %v312 = vpop.f32.mrf.mxu0
    %v313 = vadd.f32 0.0, %v312
    %314 = vmatmul.f32.gmra.mxu0 %v258
    %v315 = vpop.f32.mrf.mxu0
    %v316 = vadd.f32 0.0, %v315
    %317 = vmatmul.f32.gmra.mxu0 %v261
    %v318 = vpop.f32.mrf.mxu0
    %v319 = vadd.f32 0.0, %v318
    %320 = vmatmul.f32.gmra.mxu0 %v264
    %v321 = vpop.f32.mrf.mxu0
    %v322 = vadd.f32 0.0, %v321
    %323 = vdwg.mxu0
    %324 = vmatpush.msra.mxu0 0.0
    %325 = vmatpush.msra.mxu0 0.0
    %326 = vmatpush.msra.mxu0 0.0
    %327 = vmatpush.msra.mxu0 0.0
    %328 = vmatpush.msra.mxu0 0.0
    %329 = vmatpush.msra.mxu0 0.0
    %330 = vmatpush.msra.mxu0 0.0
    %331 = vmatpush.msra.mxu0 0.0
    %332 = vmatpush.msra.mxu0 0.0
    %333 = vmatpush.msra.mxu0 0.0
    %334 = vmatpush.msra.mxu0 0.0
    %335 = vmatpush.msra.mxu0 0.0
    %336 = vmatpush.msra.mxu0 %v212
    %337 = vmatpush.msra.mxu0 %v210
    %338 = vmatpush.msra.mxu0 %v153
    %339 = vmatpush.msra.mxu0 %v150
    %340 = vmatmul.f32.gmra.mxu0 %v255
    %v341 = vpop.f32.mrf.mxu0
    %v342 = vadd.f32 0.0, %v341
    %343 = vmatmul.f32.gmra.mxu0 %v258
    %v344 = vpop.f32.mrf.mxu0
    %v345 = vadd.f32 0.0, %v344
    %346 = vmatmul.f32.gmra.mxu0 %v261
    %v347 = vpop.f32.mrf.mxu0
    %v348 = vadd.f32 0.0, %v347
    %349 = vmatmul.f32.gmra.mxu0 %v264
    %v350 = vpop.f32.mrf.mxu0
    %v351 = vadd.f32 0.0, %v350
    %352 = vdwg.mxu0
    %353 = vmatpush.msra.mxu0 0.0
    %354 = vmatpush.msra.mxu0 0.0
    %355 = vmatpush.msra.mxu0 0.0
    %356 = vmatpush.msra.mxu0 0.0
    %357 = vmatpush.msra.mxu0 0.0
    %358 = vmatpush.msra.mxu0 0.0
    %359 = vmatpush.msra.mxu0 0.0
    %360 = vmatpush.msra.mxu0 0.0
    %361 = vmatpush.msra.mxu0 0.0
    %362 = vmatpush.msra.mxu0 0.0
    %363 = vmatpush.msra.mxu0 0.0
    %364 = vmatpush.msra.mxu0 0.0
    %365 = vmatpush.msra.mxu0 %v216
    %366 = vmatpush.msra.mxu0 %v214
    %367 = vmatpush.msra.mxu0 %v159
    %368 = vmatpush.msra.mxu0 %v156
    %369 = vmatmul.f32.gmra.mxu0 %v255
    %v370 = vpop.f32.mrf.mxu0
    %v371 = vadd.f32 0.0, %v370
    %372 = vmatmul.f32.gmra.mxu0 %v258
    %v373 = vpop.f32.mrf.mxu0
    %v374 = vadd.f32 0.0, %v373
    %375 = vmatmul.f32.gmra.mxu0 %v261
    %v376 = vpop.f32.mrf.mxu0
    %v377 = vadd.f32 0.0, %v376
    %378 = vmatmul.f32.gmra.mxu0 %v264
    %v379 = vpop.f32.mrf.mxu0
    %v380 = vadd.f32 0.0, %v379
    %381 = vdwg.mxu0
    %382 = vmatpush.msra.mxu0 0.0
    %383 = vmatpush.msra.mxu0 0.0
    %384 = vmatpush.msra.mxu0 0.0
    %385 = vmatpush.msra.mxu0 0.0
    %386 = vmatpush.msra.mxu0 0.0
    %387 = vmatpush.msra.mxu0 0.0
    %388 = vmatpush.msra.mxu0 0.0
    %389 = vmatpush.msra.mxu0 0.0
    %390 = vmatpush.msra.mxu0 0.0
    %391 = vmatpush.msra.mxu0 0.0
    %392 = vmatpush.msra.mxu0 0.0
    %393 = vmatpush.msra.mxu0 0.0
    %394 = vmatpush.msra.mxu0 %v220
    %395 = vmatpush.msra.mxu0 %v218
    %396 = vmatpush.msra.mxu0 %v165
    %397 = vmatpush.msra.mxu0 %v162
    %398 = vmatmul.f32.gmra.mxu0 %v255
    %v399 = vpop.f32.mrf.mxu0
    %v400 = vadd.f32 0.0, %v399
    %401 = vmatmul.f32.gmra.mxu0 %v258
    %v402 = vpop.f32.mrf.mxu0
    %v403 = vadd.f32 0.0, %v402
    %404 = vmatmul.f32.gmra.mxu0 %v261
    %v405 = vpop.f32.mrf.mxu0
    %v406 = vadd.f32 0.0, %v405
    %407 = vmatmul.f32.gmra.mxu0 %v264
    %v408 = vpop.f32.mrf.mxu0
    %v409 = vadd.f32 0.0, %v408
    %410 = vdwg.mxu0
    %411 = vmatpush.msra.mxu0 0.0
    %412 = vmatpush.msra.mxu0 0.0
    %413 = vmatpush.msra.mxu0 0.0
    %414 = vmatpush.msra.mxu0 0.0
    %415 = vmatpush.msra.mxu0 0.0
    %416 = vmatpush.msra.mxu0 0.0
    %417 = vmatpush.msra.mxu0 0.0
    %418 = vmatpush.msra.mxu0 0.0
    %419 = vmatpush.msra.mxu0 0.0
    %420 = vmatpush.msra.mxu0 0.0
    %421 = vmatpush.msra.mxu0 0.0
    %422 = vmatpush.msra.mxu0 0.0
    %423 = vmatpush.msra.mxu0 %v224
    %424 = vmatpush.msra.mxu0 %v222
    %425 = vmatpush.msra.mxu0 %v171
    %426 = vmatpush.msra.mxu0 %v168
    %427 = vmatmul.f32.gmra.mxu0 %v255
    %v428 = vpop.f32.mrf.mxu0
    %v429 = vadd.f32 0.0, %v428
    %430 = vmatmul.f32.gmra.mxu0 %v258
    %v431 = vpop.f32.mrf.mxu0
    %v432 = vadd.f32 0.0, %v431
    %433 = vmatmul.f32.gmra.mxu0 %v261
    %v434 = vpop.f32.mrf.mxu0
    %v435 = vadd.f32 0.0, %v434
    %436 = vmatmul.f32.gmra.mxu0 %v264
    %v437 = vpop.f32.mrf.mxu0
    %v438 = vadd.f32 0.0, %v437
    %439 = vdwg.mxu0
    %440 = vmatpush.msra.mxu0 0.0
    %441 = vmatpush.msra.mxu0 0.0
    %442 = vmatpush.msra.mxu0 0.0
    %443 = vmatpush.msra.mxu0 0.0
    %444 = vmatpush.msra.mxu0 0.0
    %445 = vmatpush.msra.mxu0 0.0
    %446 = vmatpush.msra.mxu0 0.0
    %447 = vmatpush.msra.mxu0 0.0
    %448 = vmatpush.msra.mxu0 0.0
    %449 = vmatpush.msra.mxu0 0.0
    %450 = vmatpush.msra.mxu0 0.0
    %451 = vmatpush.msra.mxu0 0.0
    %452 = vmatpush.msra.mxu0 %v228
    %453 = vmatpush.msra.mxu0 %v226
    %454 = vmatpush.msra.mxu0 %v177
    %455 = vmatpush.msra.mxu0 %v174
    %456 = vmatmul.f32.gmra.mxu0 %v255
    %v457 = vpop.f32.mrf.mxu0
    %v458 = vadd.f32 0.0, %v457
    %459 = vmatmul.f32.gmra.mxu0 %v258
    %v460 = vpop.f32.mrf.mxu0
    %v461 = vadd.f32 0.0, %v460
    %462 = vmatmul.f32.gmra.mxu0 %v261
    %v463 = vpop.f32.mrf.mxu0
    %v464 = vadd.f32 0.0, %v463
    %465 = vmatmul.f32.gmra.mxu0 %v264
    %v466 = vpop.f32.mrf.mxu0
    %v467 = vadd.f32 0.0, %v466
    %468 = vdwg.mxu0
    %469 = vmatpush.msra.mxu0 0.0
    %470 = vmatpush.msra.mxu0 0.0
    %471 = vmatpush.msra.mxu0 0.0
    %472 = vmatpush.msra.mxu0 0.0
    %473 = vmatpush.msra.mxu0 0.0
    %474 = vmatpush.msra.mxu0 0.0
    %475 = vmatpush.msra.mxu0 0.0
    %476 = vmatpush.msra.mxu0 0.0
    %477 = vmatpush.msra.mxu0 0.0
    %478 = vmatpush.msra.mxu0 0.0
    %479 = vmatpush.msra.mxu0 0.0
    %480 = vmatpush.msra.mxu0 0.0
    %481 = vmatpush.msra.mxu0 %v232
    %482 = vmatpush.msra.mxu0 %v230
    %483 = vmatpush.msra.mxu0 %v183
    %484 = vmatpush.msra.mxu0 %v180
    %485 = vmatmul.f32.gmra.mxu0 %v255
    %v486 = vpop.f32.mrf.mxu0
    %v487 = vadd.f32 0.0, %v486
    %488 = vmatmul.f32.gmra.mxu0 %v258
    %v489 = vpop.f32.mrf.mxu0
    %v490 = vadd.f32 0.0, %v489
    %491 = vmatmul.f32.gmra.mxu0 %v261
    %v492 = vpop.f32.mrf.mxu0
    %v493 = vadd.f32 0.0, %v492
    %494 = vmatmul.f32.gmra.mxu0 %v264
    %v495 = vpop.f32.mrf.mxu0
    %v496 = vadd.f32 0.0, %v495
    %497 = vdwg.mxu0
    %v498 = vld [vmem:[%s4] sm:$0xff]
    %v499 = vld [vmem:[%s4 + $0x8] sm:$0xff]
    %v500 = vld [vmem:[%s4 + $0x10] sm:$0xff]
    %v501 = vld [vmem:[%s4 + $0x18] sm:$0xff]
    %v502 = vmul.f32 %v284, %v498
    %v503 = vmul.f32 %v287, %v499
    %v504 = vmul.f32 %v290, %v500
    %v505 = vmul.f32 %v293, %v501
    %v506 = vmul.f32 %v313, %v498
    %v507 = vmul.f32 %v316, %v499
    %v508 = vmul.f32 %v319, %v500
    %v509 = vmul.f32 %v322, %v501
    %v510 = vmul.f32 %v342, %v498
    %v511 = vmul.f32 %v345, %v499
    %v512 = vmul.f32 %v348, %v500
    %v513 = vmul.f32 %v351, %v501
    %v514 = vmul.f32 %v371, %v498
    %v515 = vmul.f32 %v374, %v499
    %v516 = vmul.f32 %v377, %v500
    %v517 = vmul.f32 %v380, %v501
    %v518 = vmul.f32 %v400, %v498
    %v519 = vmul.f32 %v403, %v499
    %v520 = vmul.f32 %v406, %v500
    %v521 = vmul.f32 %v409, %v501
    %v522 = vmul.f32 %v429, %v498
    %v523 = vmul.f32 %v432, %v499
    %v524 = vmul.f32 %v435, %v500
    %v525 = vmul.f32 %v438, %v501
    %v526 = vmul.f32 %v458, %v498
    %v527 = vmul.f32 %v461, %v499
    %v528 = vmul.f32 %v464, %v500
    %v529 = vmul.f32 %v467, %v501
    %v530 = vmul.f32 %v487, %v498
    %v531 = vmul.f32 %v490, %v499
    %v532 = vmul.f32 %v493, %v500
    %v533 = vmul.f32 %v496, %v501
    %v534 = vld [vmem:[#allocation5] sm:$0xff]
    %v535 = vld [vmem:[#allocation5 + $0x8] sm:$0xff]
    %v536 = vld [vmem:[#allocation5 + $0x10] sm:$0xff]
    %v537 = vld [vmem:[#allocation5 + $0x18] sm:$0xff]
    %v539 = vsel %vm253, %v534, 0
    %v542 = vsel %vm253, %v535, 0
    %v545 = vsel %vm253, %v536, 0
    %v548 = vsel %vm253, %v537, 0
    %550 = vmatpush.msra.mxu0 0.0
    %551 = vmatpush.msra.mxu0 0.0
    %552 = vmatpush.msra.mxu0 0.0
    %553 = vmatpush.msra.mxu0 0.0
    %554 = vmatpush.msra.mxu0 0.0
    %555 = vmatpush.msra.mxu0 0.0
    %556 = vmatpush.msra.mxu0 0.0
    %557 = vmatpush.msra.mxu0 0.0
    %558 = vmatpush.msra.mxu0 0.0
    %559 = vmatpush.msra.mxu0 0.0
    %560 = vmatpush.msra.mxu0 0.0
    %561 = vmatpush.msra.mxu0 0.0
    %562 = vmatpush.msra.mxu0 %v505
    %563 = vmatpush.msra.mxu0 %v504
    %564 = vmatpush.msra.mxu0 %v503
    %565 = vmatpush.msra.mxu0 %v502
    %566 = vmatmul.f32.gmra.mxu0 %v539
    %v567 = vpop.f32.mrf.mxu0
    %v568 = vadd.f32 0.0, %v567
    %569 = vmatmul.f32.gmra.mxu0 %v542
    %v570 = vpop.f32.mrf.mxu0
    %v571 = vadd.f32 0.0, %v570
    %572 = vmatmul.f32.gmra.mxu0 %v545
    %v573 = vpop.f32.mrf.mxu0
    %v574 = vadd.f32 0.0, %v573
    %575 = vmatmul.f32.gmra.mxu0 %v548
    %v576 = vpop.f32.mrf.mxu0
    %v577 = vadd.f32 0.0, %v576
    %578 = vdwg.mxu0
    %579 = vmatpush.msra.mxu0 0.0
    %580 = vmatpush.msra.mxu0 0.0
    %581 = vmatpush.msra.mxu0 0.0
    %582 = vmatpush.msra.mxu0 0.0
    %583 = vmatpush.msra.mxu0 0.0
    %584 = vmatpush.msra.mxu0 0.0
    %585 = vmatpush.msra.mxu0 0.0
    %586 = vmatpush.msra.mxu0 0.0
    %587 = vmatpush.msra.mxu0 0.0
    %588 = vmatpush.msra.mxu0 0.0
    %589 = vmatpush.msra.mxu0 0.0
    %590 = vmatpush.msra.mxu0 0.0
    %591 = vmatpush.msra.mxu0 %v509
    %592 = vmatpush.msra.mxu0 %v508
    %593 = vmatpush.msra.mxu0 %v507
    %594 = vmatpush.msra.mxu0 %v506
    %595 = vmatmul.f32.gmra.mxu0 %v539
    %v596 = vpop.f32.mrf.mxu0
    %v597 = vadd.f32 0.0, %v596
    %598 = vmatmul.f32.gmra.mxu0 %v542
    %v599 = vpop.f32.mrf.mxu0
    %v600 = vadd.f32 0.0, %v599
    %601 = vmatmul.f32.gmra.mxu0 %v545
    %v602 = vpop.f32.mrf.mxu0
    %v603 = vadd.f32 0.0, %v602
    %604 = vmatmul.f32.gmra.mxu0 %v548
    %v605 = vpop.f32.mrf.mxu0
    %v606 = vadd.f32 0.0, %v605
    %607 = vdwg.mxu0
    %608 = vmatpush.msra.mxu0 0.0
    %609 = vmatpush.msra.mxu0 0.0
    %610 = vmatpush.msra.mxu0 0.0
    %611 = vmatpush.msra.mxu0 0.0
    %612 = vmatpush.msra.mxu0 0.0
    %613 = vmatpush.msra.mxu0 0.0
    %614 = vmatpush.msra.mxu0 0.0
    %615 = vmatpush.msra.mxu0 0.0
    %616 = vmatpush.msra.mxu0 0.0
    %617 = vmatpush.msra.mxu0 0.0
    %618 = vmatpush.msra.mxu0 0.0
    %619 = vmatpush.msra.mxu0 0.0
    %620 = vmatpush.msra.mxu0 %v513
    %621 = vmatpush.msra.mxu0 %v512
    %622 = vmatpush.msra.mxu0 %v511
    %623 = vmatpush.msra.mxu0 %v510
    %624 = vmatmul.f32.gmra.mxu0 %v539
    %v625 = vpop.f32.mrf.mxu0
    %v626 = vadd.f32 0.0, %v625
    %627 = vmatmul.f32.gmra.mxu0 %v542
    %v628 = vpop.f32.mrf.mxu0
    %v629 = vadd.f32 0.0, %v628
    %630 = vmatmul.f32.gmra.mxu0 %v545
    %v631 = vpop.f32.mrf.mxu0
    %v632 = vadd.f32 0.0, %v631
    %633 = vmatmul.f32.gmra.mxu0 %v548
    %v634 = vpop.f32.mrf.mxu0
    %v635 = vadd.f32 0.0, %v634
    %636 = vdwg.mxu0
    %637 = vmatpush.msra.mxu0 0.0
    %638 = vmatpush.msra.mxu0 0.0
    %639 = vmatpush.msra.mxu0 0.0
    %640 = vmatpush.msra.mxu0 0.0
    %641 = vmatpush.msra.mxu0 0.0
    %642 = vmatpush.msra.mxu0 0.0
    %643 = vmatpush.msra.mxu0 0.0
    %644 = vmatpush.msra.mxu0 0.0
    %645 = vmatpush.msra.mxu0 0.0
    %646 = vmatpush.msra.mxu0 0.0
    %647 = vmatpush.msra.mxu0 0.0
    %648 = vmatpush.msra.mxu0 0.0
    %649 = vmatpush.msra.mxu0 %v517
    %650 = vmatpush.msra.mxu0 %v516
    %651 = vmatpush.msra.mxu0 %v515
    %652 = vmatpush.msra.mxu0 %v514
    %653 = vmatmul.f32.gmra.mxu0 %v539
    %v654 = vpop.f32.mrf.mxu0
    %v655 = vadd.f32 0.0, %v654
    %656 = vmatmul.f32.gmra.mxu0 %v542
    %v657 = vpop.f32.mrf.mxu0
    %v658 = vadd.f32 0.0, %v657
    %659 = vmatmul.f32.gmra.mxu0 %v545
    %v660 = vpop.f32.mrf.mxu0
    %v661 = vadd.f32 0.0, %v660
    %662 = vmatmul.f32.gmra.mxu0 %v548
    %v663 = vpop.f32.mrf.mxu0
    %v664 = vadd.f32 0.0, %v663
    %665 = vdwg.mxu0
    %666 = vmatpush.msra.mxu0 0.0
    %667 = vmatpush.msra.mxu0 0.0
    %668 = vmatpush.msra.mxu0 0.0
    %669 = vmatpush.msra.mxu0 0.0
    %670 = vmatpush.msra.mxu0 0.0
    %671 = vmatpush.msra.mxu0 0.0
    %672 = vmatpush.msra.mxu0 0.0
    %673 = vmatpush.msra.mxu0 0.0
    %674 = vmatpush.msra.mxu0 0.0
    %675 = vmatpush.msra.mxu0 0.0
    %676 = vmatpush.msra.mxu0 0.0
    %677 = vmatpush.msra.mxu0 0.0
    %678 = vmatpush.msra.mxu0 %v521
    %679 = vmatpush.msra.mxu0 %v520
    %680 = vmatpush.msra.mxu0 %v519
    %681 = vmatpush.msra.mxu0 %v518
    %682 = vmatmul.f32.gmra.mxu0 %v539
    %v683 = vpop.f32.mrf.mxu0
    %v684 = vadd.f32 0.0, %v683
    %685 = vmatmul.f32.gmra.mxu0 %v542
    %v686 = vpop.f32.mrf.mxu0
    %v687 = vadd.f32 0.0, %v686
    %688 = vmatmul.f32.gmra.mxu0 %v545
    %v689 = vpop.f32.mrf.mxu0
    %v690 = vadd.f32 0.0, %v689
    %691 = vmatmul.f32.gmra.mxu0 %v548
    %v692 = vpop.f32.mrf.mxu0
    %v693 = vadd.f32 0.0, %v692
    %694 = vdwg.mxu0
    %695 = vmatpush.msra.mxu0 0.0
    %696 = vmatpush.msra.mxu0 0.0
    %697 = vmatpush.msra.mxu0 0.0
    %698 = vmatpush.msra.mxu0 0.0
    %699 = vmatpush.msra.mxu0 0.0
    %700 = vmatpush.msra.mxu0 0.0
    %701 = vmatpush.msra.mxu0 0.0
    %702 = vmatpush.msra.mxu0 0.0
    %703 = vmatpush.msra.mxu0 0.0
    %704 = vmatpush.msra.mxu0 0.0
    %705 = vmatpush.msra.mxu0 0.0
    %706 = vmatpush.msra.mxu0 0.0
    %707 = vmatpush.msra.mxu0 %v525
    %708 = vmatpush.msra.mxu0 %v524
    %709 = vmatpush.msra.mxu0 %v523
    %710 = vmatpush.msra.mxu0 %v522
    %711 = vmatmul.f32.gmra.mxu0 %v539
    %v712 = vpop.f32.mrf.mxu0
    %v713 = vadd.f32 0.0, %v712
    %714 = vmatmul.f32.gmra.mxu0 %v542
    %v715 = vpop.f32.mrf.mxu0
    %v716 = vadd.f32 0.0, %v715
    %717 = vmatmul.f32.gmra.mxu0 %v545
    %v718 = vpop.f32.mrf.mxu0
    %v719 = vadd.f32 0.0, %v718
    %720 = vmatmul.f32.gmra.mxu0 %v548
    %v721 = vpop.f32.mrf.mxu0
    %v722 = vadd.f32 0.0, %v721
    %723 = vdwg.mxu0
    %724 = vmatpush.msra.mxu0 0.0
    %725 = vmatpush.msra.mxu0 0.0
    %726 = vmatpush.msra.mxu0 0.0
    %727 = vmatpush.msra.mxu0 0.0
    %728 = vmatpush.msra.mxu0 0.0
    %729 = vmatpush.msra.mxu0 0.0
    %730 = vmatpush.msra.mxu0 0.0
    %731 = vmatpush.msra.mxu0 0.0
    %732 = vmatpush.msra.mxu0 0.0
    %733 = vmatpush.msra.mxu0 0.0
    %734 = vmatpush.msra.mxu0 0.0
    %735 = vmatpush.msra.mxu0 0.0
    %736 = vmatpush.msra.mxu0 %v529
    %737 = vmatpush.msra.mxu0 %v528
    %738 = vmatpush.msra.mxu0 %v527
    %739 = vmatpush.msra.mxu0 %v526
    %740 = vmatmul.f32.gmra.mxu0 %v539
    %v741 = vpop.f32.mrf.mxu0
    %v742 = vadd.f32 0.0, %v741
    %743 = vmatmul.f32.gmra.mxu0 %v542
    %v744 = vpop.f32.mrf.mxu0
    %v745 = vadd.f32 0.0, %v744
    %746 = vmatmul.f32.gmra.mxu0 %v545
    %v747 = vpop.f32.mrf.mxu0
    %v748 = vadd.f32 0.0, %v747
    %749 = vmatmul.f32.gmra.mxu0 %v548
    %v750 = vpop.f32.mrf.mxu0
    %v751 = vadd.f32 0.0, %v750
    %752 = vdwg.mxu0
    %753 = vmatpush.msra.mxu0 0.0
    %754 = vmatpush.msra.mxu0 0.0
    %755 = vmatpush.msra.mxu0 0.0
    %756 = vmatpush.msra.mxu0 0.0
    %757 = vmatpush.msra.mxu0 0.0
    %758 = vmatpush.msra.mxu0 0.0
    %759 = vmatpush.msra.mxu0 0.0
    %760 = vmatpush.msra.mxu0 0.0
    %761 = vmatpush.msra.mxu0 0.0
    %762 = vmatpush.msra.mxu0 0.0
    %763 = vmatpush.msra.mxu0 0.0
    %764 = vmatpush.msra.mxu0 0.0
    %765 = vmatpush.msra.mxu0 %v533
    %766 = vmatpush.msra.mxu0 %v532
    %767 = vmatpush.msra.mxu0 %v531
    %768 = vmatpush.msra.mxu0 %v530
    %769 = vmatmul.f32.gmra.mxu0 %v539
    %v770 = vpop.f32.mrf.mxu0
    %v771 = vadd.f32 0.0, %v770
    %772 = vmatmul.f32.gmra.mxu0 %v542
    %v773 = vpop.f32.mrf.mxu0
    %v774 = vadd.f32 0.0, %v773
    %775 = vmatmul.f32.gmra.mxu0 %v545
    %v776 = vpop.f32.mrf.mxu0
    %v777 = vadd.f32 0.0, %v776
    %778 = vmatmul.f32.gmra.mxu0 %v548
    %v779 = vpop.f32.mrf.mxu0
    %v780 = vadd.f32 0.0, %v779
    %781 = vdwg.mxu0
    %v782 = vld [vmem:[%s1] sm:$0xff]
    %v783 = vld [vmem:[%s1 + $0x8] sm:$0xff]
    %v785 = vsel %vm71, %v568, 0
    %v788 = vsel %vm71, %v571, 0
    %v791 = vsel %vm71, %v574, 0
    %v794 = vsel %vm71, %v577, 0
    %v797 = vsel %vm71, %v597, 0
    %v800 = vsel %vm71, %v600, 0
    %v803 = vsel %vm71, %v603, 0
    %v806 = vsel %vm71, %v606, 0
    %v809 = vsel %vm71, %v626, 0
    %v812 = vsel %vm71, %v629, 0
    %v815 = vsel %vm71, %v632, 0
    %v818 = vsel %vm71, %v635, 0
    %v821 = vsel %vm71, %v655, 0
    %v824 = vsel %vm71, %v658, 0
    %v827 = vsel %vm71, %v661, 0
    %v830 = vsel %vm71, %v664, 0
    %v833 = vsel %vm71, %v684, 0
    %v836 = vsel %vm71, %v687, 0
    %v839 = vsel %vm71, %v690, 0
    %v842 = vsel %vm71, %v693, 0
    %v845 = vsel %vm71, %v713, 0
    %v848 = vsel %vm71, %v716, 0
    %v851 = vsel %vm71, %v719, 0
    %v854 = vsel %vm71, %v722, 0
    %v857 = vsel %vm71, %v742, 0
    %v860 = vsel %vm71, %v745, 0
    %v863 = vsel %vm71, %v748, 0
    %v866 = vsel %vm71, %v751, 0
    %v869 = vsel %vm71, %v771, 0
    %v872 = vsel %vm71, %v774, 0
    %v875 = vsel %vm71, %v777, 0
    %v878 = vsel %vm71, %v780, 0
    %880 = vmatpush.msra.mxu0 0.0
    %881 = vmatpush.msra.mxu0 0.0
    %882 = vmatpush.msra.mxu0 0.0
    %883 = vmatpush.msra.mxu0 0.0
    %884 = vmatpush.msra.mxu0 0.0
    %885 = vmatpush.msra.mxu0 0.0
    %886 = vmatpush.msra.mxu0 0.0
    %887 = vmatpush.msra.mxu0 0.0
    %888 = vmatpush.msra.mxu0 0.0
    %889 = vmatpush.msra.mxu0 0.0
    %890 = vmatpush.msra.mxu0 0.0
    %891 = vmatpush.msra.mxu0 0.0
    %892 = vmatpush.msra.mxu0 0.0
    %893 = vmatpush.msra.mxu0 0.0
    %894 = vmatpush.msra.mxu0 %v783
    %895 = vmatpush.msra.mxu0 %v782
    %896 = vmatmul.f32.gmra.mxu0 %v785
    %v897 = vpop.f32.mrf.mxu0
    %v898 = vadd.f32 0.0, %v897
    %899 = vmatmul.f32.gmra.mxu0 %v788
    %v900 = vpop.f32.mrf.mxu0
    %v901 = vadd.f32 0.0, %v900
    %902 = vmatmul.f32.gmra.mxu0 %v791
    %v903 = vpop.f32.mrf.mxu0
    %v904 = vadd.f32 0.0, %v903
    %905 = vmatmul.f32.gmra.mxu0 %v794
    %v906 = vpop.f32.mrf.mxu0
    %v907 = vadd.f32 0.0, %v906
    %908 = vmatmul.f32.gmra.mxu0 %v797
    %v909 = vpop.f32.mrf.mxu0
    %v910 = vadd.f32 0.0, %v909
    %911 = vmatmul.f32.gmra.mxu0 %v800
    %v912 = vpop.f32.mrf.mxu0
    %v913 = vadd.f32 0.0, %v912
    %914 = vmatmul.f32.gmra.mxu0 %v803
    %v915 = vpop.f32.mrf.mxu0
    %v916 = vadd.f32 0.0, %v915
    %917 = vmatmul.f32.gmra.mxu0 %v806
    %v918 = vpop.f32.mrf.mxu0
    %v919 = vadd.f32 0.0, %v918
    %920 = vmatmul.f32.gmra.mxu0 %v809
    %v921 = vpop.f32.mrf.mxu0
    %v922 = vadd.f32 0.0, %v921
    %923 = vmatmul.f32.gmra.mxu0 %v812
    %v924 = vpop.f32.mrf.mxu0
    %v925 = vadd.f32 0.0, %v924
    %926 = vmatmul.f32.gmra.mxu0 %v815
    %v927 = vpop.f32.mrf.mxu0
    %v928 = vadd.f32 0.0, %v927
    %929 = vmatmul.f32.gmra.mxu0 %v818
    %v930 = vpop.f32.mrf.mxu0
    %v931 = vadd.f32 0.0, %v930
    %932 = vmatmul.f32.gmra.mxu0 %v821
    %v933 = vpop.f32.mrf.mxu0
    %v934 = vadd.f32 0.0, %v933
    %935 = vmatmul.f32.gmra.mxu0 %v824
    %v936 = vpop.f32.mrf.mxu0
    %v937 = vadd.f32 0.0, %v936
    %938 = vmatmul.f32.gmra.mxu0 %v827
    %v939 = vpop.f32.mrf.mxu0
    %v940 = vadd.f32 0.0, %v939
    %941 = vmatmul.f32.gmra.mxu0 %v830
    %v942 = vpop.f32.mrf.mxu0
    %v943 = vadd.f32 0.0, %v942
    %944 = vmatmul.f32.gmra.mxu0 %v833
    %v945 = vpop.f32.mrf.mxu0
    %v946 = vadd.f32 0.0, %v945
    %947 = vmatmul.f32.gmra.mxu0 %v836
    %v948 = vpop.f32.mrf.mxu0
    %v949 = vadd.f32 0.0, %v948
    %950 = vmatmul.f32.gmra.mxu0 %v839
    %v951 = vpop.f32.mrf.mxu0
    %v952 = vadd.f32 0.0, %v951
    %953 = vmatmul.f32.gmra.mxu0 %v842
    %v954 = vpop.f32.mrf.mxu0
    %v955 = vadd.f32 0.0, %v954
    %956 = vmatmul.f32.gmra.mxu0 %v845
    %v957 = vpop.f32.mrf.mxu0
    %v958 = vadd.f32 0.0, %v957
    %959 = vmatmul.f32.gmra.mxu0 %v848
    %v960 = vpop.f32.mrf.mxu0
    %v961 = vadd.f32 0.0, %v960
    %962 = vmatmul.f32.gmra.mxu0 %v851
    %v963 = vpop.f32.mrf.mxu0
    %v964 = vadd.f32 0.0, %v963
    %965 = vmatmul.f32.gmra.mxu0 %v854
    %v966 = vpop.f32.mrf.mxu0
    %v967 = vadd.f32 0.0, %v966
    %968 = vmatmul.f32.gmra.mxu0 %v857
    %v969 = vpop.f32.mrf.mxu0
    %v970 = vadd.f32 0.0, %v969
    %971 = vmatmul.f32.gmra.mxu0 %v860
    %v972 = vpop.f32.mrf.mxu0
    %v973 = vadd.f32 0.0, %v972
    %974 = vmatmul.f32.gmra.mxu0 %v863
    %v975 = vpop.f32.mrf.mxu0
    %v976 = vadd.f32 0.0, %v975
    %977 = vmatmul.f32.gmra.mxu0 %v866
    %v978 = vpop.f32.mrf.mxu0
    %v979 = vadd.f32 0.0, %v978
    %980 = vmatmul.f32.gmra.mxu0 %v869
    %v981 = vpop.f32.mrf.mxu0
    %v982 = vadd.f32 0.0, %v981
    %983 = vmatmul.f32.gmra.mxu0 %v872
    %v984 = vpop.f32.mrf.mxu0
    %v985 = vadd.f32 0.0, %v984
    %986 = vmatmul.f32.gmra.mxu0 %v875
    %v987 = vpop.f32.mrf.mxu0
    %v988 = vadd.f32 0.0, %v987
    %989 = vmatmul.f32.gmra.mxu0 %v878
    %v990 = vpop.f32.mrf.mxu0
    %v991 = vadd.f32 0.0, %v990
    %992 = vdwg.mxu0
    %1009 = vrot.lane.b32.xlu0 %v904, 112
    %v1010 = vpop.permute.xlu0 %1009
    %1011 = vrot.lane.b32.xlu0 %v907, 112
    %v1012 = vpop.permute.xlu0 %1011
    %1013 = vrot.lane.b32.xlu0 %v916, 112
    %v1014 = vpop.permute.xlu0 %1013
    %1015 = vrot.lane.b32.xlu0 %v919, 112
    %v1016 = vpop.permute.xlu0 %1015
    %1017 = vrot.lane.b32.xlu0 %v928, 112
    %v1018 = vpop.permute.xlu0 %1017
    %1019 = vrot.lane.b32.xlu0 %v931, 112
    %v1020 = vpop.permute.xlu0 %1019
    %1021 = vrot.lane.b32.xlu0 %v940, 112
    %v1022 = vpop.permute.xlu0 %1021
    %1023 = vrot.lane.b32.xlu0 %v943, 112
    %v1024 = vpop.permute.xlu0 %1023
    %1025 = vrot.lane.b32.xlu0 %v952, 112
    %v1026 = vpop.permute.xlu0 %1025
    %1027 = vrot.lane.b32.xlu0 %v955, 112
    %v1028 = vpop.permute.xlu0 %1027
    %1029 = vrot.lane.b32.xlu0 %v964, 112
    %v1030 = vpop.permute.xlu0 %1029
    %1031 = vrot.lane.b32.xlu0 %v967, 112
    %v1032 = vpop.permute.xlu0 %1031
    %1033 = vrot.lane.b32.xlu0 %v976, 112
    %v1034 = vpop.permute.xlu0 %1033
    %1035 = vrot.lane.b32.xlu0 %v979, 112
    %v1036 = vpop.permute.xlu0 %1035
    %1037 = vrot.lane.b32.xlu0 %v988, 112
    %v1038 = vpop.permute.xlu0 %1037
    %1039 = vrot.lane.b32.xlu0 %v991, 112
    %v1040 = vpop.permute.xlu0 %1039
    %v1057 = vadd.f32 %v898, %v1010
    %v1058 = vadd.f32 %v901, %v1012
    %v1059 = vadd.f32 %v910, %v1014
    %v1060 = vadd.f32 %v913, %v1016
    %v1061 = vadd.f32 %v922, %v1018
    %v1062 = vadd.f32 %v925, %v1020
    %v1063 = vadd.f32 %v934, %v1022
    %v1064 = vadd.f32 %v937, %v1024
    %v1065 = vadd.f32 %v946, %v1026
    %v1066 = vadd.f32 %v949, %v1028
    %v1067 = vadd.f32 %v958, %v1030
    %v1068 = vadd.f32 %v961, %v1032
    %v1069 = vadd.f32 %v970, %v1034
    %v1070 = vadd.f32 %v973, %v1036
    %v1071 = vadd.f32 %v982, %v1038
    %v1072 = vadd.f32 %v985, %v1040
    %1073 = vst.msk [vmem:[#allocation7] sm:$0xff] %vm71, %v1057
    %1074 = vst.msk [vmem:[#allocation7 + $0x8] sm:$0xff] %vm71, %v1058
    %1075 = vst.msk [vmem:[#allocation7 + $0x10] sm:$0xff] %vm71, %v1059
    %1076 = vst.msk [vmem:[#allocation7 + $0x18] sm:$0xff] %vm71, %v1060
    %1077 = vst.msk [vmem:[#allocation7 + $0x20] sm:$0xff] %vm71, %v1061
    %1078 = vst.msk [vmem:[#allocation7 + $0x28] sm:$0xff] %vm71, %v1062
    %1079 = vst.msk [vmem:[#allocation7 + $0x30] sm:$0xff] %vm71, %v1063
    %1080 = vst.msk [vmem:[#allocation7 + $0x38] sm:$0xff] %vm71, %v1064
    %1081 = vst.msk [vmem:[#allocation7 + $0x40] sm:$0xff] %vm71, %v1065
    %1082 = vst.msk [vmem:[#allocation7 + $0x48] sm:$0xff] %vm71, %v1066
    %1083 = vst.msk [vmem:[#allocation7 + $0x50] sm:$0xff] %vm71, %v1067
    %1084 = vst.msk [vmem:[#allocation7 + $0x58] sm:$0xff] %vm71, %v1068
    %1085 = vst.msk [vmem:[#allocation7 + $0x60] sm:$0xff] %vm71, %v1069
    %1086 = vst.msk [vmem:[#allocation7 + $0x68] sm:$0xff] %vm71, %v1070
    %1087 = vst.msk [vmem:[#allocation7 + $0x70] sm:$0xff] %vm71, %v1071
    %1088 = vst.msk [vmem:[#allocation7 + $0x78] sm:$0xff] %vm71, %v1072
    // Predicated region
    $region30: #{tpu_custom_call.1} parent=1 // pred_check
      _
    $region31: #{tpu_custom_call.1} parent=1 // pred_check_branch
      %1090 = sbr.rel (0) target = $region33
    $region32: #{tpu_custom_call.1} parent=1 // pred_region
      %1092 = vsyncadd [#allocation4], 0
      %s1093 = sshll.u32 [#allocation7], 4
      %s1094 = int_to_ptr.vmem [resolvable:$true] %s1093
      %s1095 = sshll.u32 %s5, 4
      %s1096 = int_to_ptr.hbm [resolvable:$true] %s1095
      %1101 = dma.vmem_to_hbm [thread:$0]  %s1094, 2048, %s1096, [#allocation4], 128, 128, 8
    $region33: #{tpu_custom_call.1} parent=1 // pred_fallthru
      _
    // Predicated region
    $region34: #{tpu_custom_call.1} parent=1 // pred_check
      _
    $region35: #{tpu_custom_call.1} parent=1 // pred_check_branch
      %1103 = sbr.rel (0) target = $region37
    $region36: #{tpu_custom_call.1} parent=1 // pred_region
      %1105 = dma.done [#allocation4], 2048
    $region37: #{tpu_custom_call.1} parent=1 // pred_fallthru
      _
    %1106 = vsyncpa [#allocation3], 1
    %1107 = vsyncpa [#allocation6], 1
    %1108 = vsyncpa [#allocation4], 1

</llo_original>
